<compile_context>
chip_gen: v6e
topology: v6e:2x2x1
jax: 0.10.0
libtpu: 0.0.40
codegen_flags: <defaults>
</compile_context>

<pallas_src>
import functools
import math

import jax
import jax.numpy as jnp
from jax import lax
from jax.experimental import pallas as pl
from jax.experimental.pallas import tpu as pltpu

LANE = 128
_MIB = 1024 * 1024
_VMEM_LIMIT_BYTES = 48 * _MIB      # raised scoped limit; still < v7x 64 MiB physical
_FUSED_BUDGET_BYTES = 36 * _MIB    # budget for the all-resident fused fast path
_TILED_BUDGET_BYTES = 36 * _MIB    # budget for the tiled-path working set


def _round_up(x, m):
    return ((x + m - 1) // m) * m


def _pad_to(x, shape):
    pads = [(0, s - d) for d, s in zip(x.shape, shape)]
    return jnp.pad(x, pads)


def _fused_bytes(n_pad, f_pad, h_pad, c_pad):
    a = n_pad * n_pad * 2                              # A_hat bf16
    x = n_pad * f_pad * 2                              # X bf16
    w = f_pad * h_pad * 2 + h_pad * c_pad * 2          # W1, W2 bf16
    inter = 2 * n_pad * h_pad * 4 + 2 * n_pad * c_pad * 4  # xw1/h, hw2/z f32 temps
    out = n_pad * c_pad * 4
    return a + x + w + inter + out


# ---------------------------------------------------------------------------
# Fast path: everything resident, both layers fused in one kernel (small N).
# ---------------------------------------------------------------------------
def _fused_kernel(a_ref, x_ref, w1_ref, b1_ref, w2_ref, b2_ref, out_ref, *,
                  num_classes):
    # layer 1: projection + propagation + bias + relu
    xw1 = jnp.dot(x_ref[...], w1_ref[...], preferred_element_type=jnp.float32)
    h = jnp.maximum(
        jnp.dot(a_ref[...], xw1.astype(jnp.bfloat16),
                preferred_element_type=jnp.float32) + b1_ref[...], 0.0)
    # TODO(synk): training-mode dropout (pltpu.prng_seed/prng_random_bits) not
    #             implemented; eval mode => identity.
    # layer 2: projection + propagation + bias
    hw2 = jnp.dot(h.astype(jnp.bfloat16), w2_ref[...],
                  preferred_element_type=jnp.float32)
    z = jnp.dot(a_ref[...], hw2.astype(jnp.bfloat16),
                preferred_element_type=jnp.float32) + b2_ref[...]
    # masked log_softmax over the real classes (class padding masked out)
    col = lax.broadcasted_iota(jnp.int32, z.shape, 1)
    z = jnp.where(col < num_classes, z, jnp.float32(-1e30))
    m = jnp.max(z, axis=-1, keepdims=True)
    s = z - m
    lse = jnp.log(jnp.sum(jnp.exp(s), axis=-1, keepdims=True))
    out_ref[...] = s - lse


# ---------------------------------------------------------------------------
# Tiled path, kernel 1: dense projection  XW1 = X @ W1   (bf16 out)
# ---------------------------------------------------------------------------
def _proj_kernel(x_ref, w_ref, out_ref):
    out_ref[...] = jnp.dot(
        x_ref[...], w_ref[...], preferred_element_type=jnp.float32
    ).astype(out_ref.dtype)


def _project(x_pad, w_pad, tm):
    n_pad, f_pad = x_pad.shape
    h_pad = w_pad.shape[1]
    return pl.pallas_call(
        _proj_kernel,
        out_shape=jax.ShapeDtypeStruct((n_pad, h_pad), jnp.bfloat16),
        grid_spec=pltpu.PrefetchScalarGridSpec(
            num_scalar_prefetch=0,
            grid=(n_pad // tm,),
            in_specs=[
                pl.BlockSpec((tm, f_pad), lambda i: (i, 0)),
                pl.BlockSpec((f_pad, h_pad), lambda i: (0, 0)),
            ],
            out_specs=pl.BlockSpec((tm, h_pad), lambda i: (i, 0)),
        ),
        compiler_params=pltpu.CompilerParams(
            dimension_semantics=("parallel",),
            vmem_limit_bytes=_VMEM_LIMIT_BYTES,
        ),
    )(x_pad, w_pad)


# ---------------------------------------------------------------------------
# Tiled path, kernel 2: layer-1 propagation  acc += A @ XW1  (K-tiled),
#   epilogue: h = relu(acc + b1); emit HW2 = h_bf16 @ W2_bf16 (fused layer-2
#   projection so `h` never hits HBM).
# ---------------------------------------------------------------------------
def _prop1_kernel(a_ref, xw_ref, b1_ref, w2_ref, out_ref, acc_ref, *,
                  tk, resident):
    k = pl.program_id(1)

    @pl.when(k == 0)
    def _():
        acc_ref[...] = jnp.zeros_like(acc_ref)

    if resident:
        start = pl.multiple_of(k * tk, tk)
        xw = xw_ref[pl.ds(start, tk), :]
    else:
        xw = xw_ref[...]
    acc_ref[...] += jnp.dot(a_ref[...], xw, preferred_element_type=jnp.float32)

    @pl.when(k == pl.num_programs(1) - 1)
    def _():
        h = jnp.maximum(acc_ref[...] + b1_ref[...], 0.0)
        hw2 = jnp.dot(h.astype(jnp.bfloat16), w2_ref[...],
                      preferred_element_type=jnp.float32)
        out_ref[...] = hw2.astype(out_ref.dtype)


# ---------------------------------------------------------------------------
# Tiled path, kernel 3: layer-2 propagation  acc += A @ HW2  (K-tiled),
#   epilogue: z = acc + b2; masked log_softmax.
# ---------------------------------------------------------------------------
def _prop2_kernel(a_ref, hw_ref, b2_ref, out_ref, acc_ref, *,
                  tk, resident, num_classes):
    k = pl.program_id(1)

    @pl.when(k == 0)
    def _():
        acc_ref[...] = jnp.zeros_like(acc_ref)

    if resident:
        start = pl.multiple_of(k * tk, tk)
        hw = hw_ref[pl.ds(start, tk), :]
    else:
        hw = hw_ref[...]
    acc_ref[...] += jnp.dot(a_ref[...], hw, preferred_element_type=jnp.float32)

    @pl.when(k == pl.num_programs(1) - 1)
    def _():
        z = acc_ref[...] + b2_ref[...]
        col = lax.broadcasted_iota(jnp.int32, z.shape, 1)
        z = jnp.where(col < num_classes, z, jnp.float32(-1e30))
        m = jnp.max(z, axis=-1, keepdims=True)
        s = z - m
        lse = jnp.log(jnp.sum(jnp.exp(s), axis=-1, keepdims=True))
        out_ref[...] = s - lse


def _propagate_tiled(a_pad, xw1, b1_pad, w2_pad, b2_pad, tm, tk, num_classes):
    n_pad = a_pad.shape[0]
    h_pad = xw1.shape[1]
    c_pad = w2_pad.shape[1]
    grid = (n_pad // tm, n_pad // tk)
    cparams = pltpu.CompilerParams(
        dimension_semantics=("parallel", "arbitrary"),
        vmem_limit_bytes=_VMEM_LIMIT_BYTES,
    )

    # Residency decision (counts Pallas' default double-buffering).
    base = (2 * tm * tk * 2          # A tile (bf16, dbuf)
            + 2 * tm * c_pad * 2     # output tile (bf16/f32 rounded down, dbuf)
            + tm * max(h_pad, c_pad) * 4   # f32 accumulator
            + 2 * h_pad * c_pad * 2  # W2 resident (dbuf-counted)
            + 2 * (h_pad + c_pad) * 4)
    xw_resident = base + 2 * n_pad * h_pad * 2 <= _TILED_BUDGET_BYTES
    hw_resident = base + 2 * n_pad * c_pad * 2 <= _TILED_BUDGET_BYTES

    def operand_spec(dim, resident):
        if resident:
            return pl.BlockSpec((n_pad, dim), lambda i, k: (0, 0))
        return pl.BlockSpec((tk, dim), lambda i, k: (k, 0))

    # layer-1 propagation + bias + relu, fused with layer-2 projection
    hw2 = pl.pallas_call(
        functools.partial(_prop1_kernel, tk=tk, resident=xw_resident),
        out_shape=jax.ShapeDtypeStruct((n_pad, c_pad), jnp.bfloat16),
        grid_spec=pltpu.PrefetchScalarGridSpec(
            num_scalar_prefetch=0,
            grid=grid,
            in_specs=[
                pl.BlockSpec((tm, tk), lambda i, k: (i, k)),       # A tile
                operand_spec(h_pad, xw_resident),                  # XW1
                pl.BlockSpec((1, h_pad), lambda i, k: (0, 0)),     # b1 (resident)
                pl.BlockSpec((h_pad, c_pad), lambda i, k: (0, 0)), # W2 (resident)
            ],
            out_specs=pl.BlockSpec((tm, c_pad), lambda i, k: (i, 0)),
            scratch_shapes=[pltpu.VMEM((tm, h_pad), jnp.float32)],
        ),
        compiler_params=cparams,
    )(a_pad, xw1, b1_pad, w2_pad)

    # layer-2 propagation + bias + log_softmax
    out_pad = pl.pallas_call(
        functools.partial(_prop2_kernel, tk=tk, resident=hw_resident,
                          num_classes=num_classes),
        out_shape=jax.ShapeDtypeStruct((n_pad, c_pad), jnp.float32),
        grid_spec=pltpu.PrefetchScalarGridSpec(
            num_scalar_prefetch=0,
            grid=grid,
            in_specs=[
                pl.BlockSpec((tm, tk), lambda i, k: (i, k)),       # A tile
                operand_spec(c_pad, hw_resident),                  # HW2
                pl.BlockSpec((1, c_pad), lambda i, k: (0, 0)),     # b2 (resident)
            ],
            out_specs=pl.BlockSpec((tm, c_pad), lambda i, k: (i, 0)),
            scratch_shapes=[pltpu.VMEM((tm, c_pad), jnp.float32)],
        ),
        compiler_params=cparams,
    )(a_pad, hw2, b2_pad)
    return out_pad


# ---------------------------------------------------------------------------
# Wrapper: pad to lane-friendly shapes, dispatch fused vs tiled path, slice.
# ---------------------------------------------------------------------------
def digcn_net_forward(a_hat, x, w1, b1, w2, b2, *, row_tile=512, k_tile=1024,
                      fused_threshold_bytes=_FUSED_BUDGET_BYTES):
    """a_hat: (N,N), x: (N,F), w1: (F,H), b1: (H,)|(1,H), w2: (H,C), b2: (C,)|(1,C)."""
    n, f = x.shape
    h = w1.shape[1]
    c = w2.shape[1]

    f_pad = _round_up(max(f, LANE), LANE)
    h_pad = _round_up(max(h, LANE), LANE)
    c_pad = _round_up(max(c, LANE), LANE)

    bf = jnp.bfloat16
    b1_pad_row = jnp.asarray(b1, jnp.float32).reshape(1, -1)
    b2_pad_row = jnp.asarray(b2, jnp.float32).reshape(1, -1)

    # TODO(synk): the per-call pad + bf16 cast of A_hat/X/W should be hoisted
    #             and cached when the same graph is reused across forward calls.

    n_pad_small = _round_up(max(n, LANE), LANE)
    if _fused_bytes(n_pad_small, f_pad, h_pad, c_pad) <= fused_threshold_bytes:
        # ------- fused, all-resident fast path (A read once, no HBM temps) -------
        n_pad = n_pad_small
        a_pad = _pad_to(jnp.asarray(a_hat, jnp.float32).astype(bf), (n_pad, n_pad))
        x_pad = _pad_to(jnp.asarray(x, jnp.float32).astype(bf), (n_pad, f_pad))
        w1_pad = _pad_to(jnp.asarray(w1, jnp.float32).astype(bf), (f_pad, h_pad))
        w2_pad = _pad_to(jnp.asarray(w2, jnp.float32).astype(bf), (h_pad, c_pad))
        b1_pad = _pad_to(b1_pad_row, (1, h_pad))
        b2_pad = _pad_to(b2_pad_row, (1, c_pad))

        out_pad = pl.pallas_call(
            functools.partial(_fused_kernel, num_classes=c),
            out_shape=jax.ShapeDtypeStruct((n_pad, c_pad), jnp.float32),
            compiler_params=pltpu.CompilerParams(
                vmem_limit_bytes=_VMEM_LIMIT_BYTES),
        )(a_pad, x_pad, w1_pad, b1_pad, w2_pad, b2_pad)
        return out_pad[:n, :c]

    # ------- tiled big-N path -------
    tm = max(LANE, (row_tile // LANE) * LANE)
    tk = max(LANE, (k_tile // LANE) * LANE)
    # Pad N up to a multiple of both tiles so tile sizes never collapse to 128
    # and the "parallel" row axis has >= 2 tiles (feeds both v7x TensorCores).
    align = tm * tk // math.gcd(tm, tk)
    n_pad = _round_up(max(n, 2 * tm), align)

    a_pad = _pad_to(jnp.asarray(a_hat, jnp.float32).astype(bf), (n_pad, n_pad))
    x_pad = _pad_to(jnp.asarray(x, jnp.float32).astype(bf), (n_pad, f_pad))
    w1_pad = _pad_to(jnp.asarray(w1, jnp.float32).astype(bf), (f_pad, h_pad))
    w2_pad = _pad_to(jnp.asarray(w2, jnp.float32).astype(bf), (h_pad, c_pad))
    b1_pad = _pad_to(b1_pad_row, (1, h_pad))
    b2_pad = _pad_to(b2_pad_row, (1, c_pad))

    xw1 = _project(x_pad, w1_pad, tm)                      # (N_pad, H_pad) bf16
    out_pad = _propagate_tiled(a_pad, xw1, b1_pad, w2_pad, b2_pad, tm, tk, c)
    return out_pad[:n, :c]


# ---------------------------------------------------------------------------
# Helpers for the demo: parameter init + dense adjacency from edge list.
# ---------------------------------------------------------------------------
def glorot(key, shape):
    fan_in, fan_out = shape
    limit = jnp.sqrt(6.0 / (fan_in + fan_out))
    return jax.random.uniform(key, shape, jnp.float32, -limit, limit)


def build_dense_adjacency(edge_index, edge_weight, num_nodes):
    """A_hat[dst, src] = edge_weight  (torch_geometric source->target aggregation)."""
    src, dst = edge_index[0], edge_index[1]
    a = jnp.zeros((num_nodes, num_nodes), jnp.float32)
    return a.at[dst, src].add(edge_weight)


if __name__ == "__main__":
    # Small shapes consistent with the module's forward:
    #   N nodes, num_features F, args.hidden H, num_classes C
    N, F_IN, HIDDEN, CLASSES = 32, 16, 32, 8
    NUM_EDGES = 64

    key = jax.random.PRNGKey(0)
    k_x, k_src, k_dst, k_ew, k_w1, k_w2 = jax.random.split(key, 6)

    # Node features (data.x)
    x = jax.random.normal(k_x, (N, F_IN), jnp.float32)

    # Graph structure (data.edge_index, data.edge_weight) — weights pre-normalized in DIGCN
    src = jax.random.randint(k_src, (NUM_EDGES,), 0, N)
    dst = jax.random.randint(k_dst, (NUM_EDGES,), 0, N)
    edge_index = jnp.stack([src, dst], axis=0)
    edge_weight = jax.random.uniform(k_ew, (NUM_EDGES,), jnp.float32, 0.1, 1.0)
    a_hat = build_dense_adjacency(edge_index, edge_weight, N)

    # DIGCNConv parameters: glorot weight, zero bias
    w1 = glorot(k_w1, (F_IN, HIDDEN))
    b1 = jnp.zeros((1, HIDDEN), jnp.float32)
    w2 = glorot(k_w2, (HIDDEN, CLASSES))
    b2 = jnp.zeros((1, CLASSES), jnp.float32)

    # Fused fast path (used automatically at this size).
    out = digcn_net_forward(a_hat, x, w1, b1, w2, b2)
    out = jax.block_until_ready(out)
    assert out.shape == (N, CLASSES)

    # Tiled big-N path, forced at small size to validate its machinery too.
    out_tiled = digcn_net_forward(a_hat, x, w1, b1, w2, b2,
                                  fused_threshold_bytes=0)
    out_tiled = jax.block_until_ready(out_tiled)
    assert out_tiled.shape == (N, CLASSES)

    # Reference 1: precision-matched (bf16 streams, f32 MXU accumulation).
    bf = jnp.bfloat16
    dot32 = lambda a, b: jnp.dot(a, b, preferred_element_type=jnp.float32)
    a_bf = a_hat.astype(bf)
    xw1_m = dot32(x.astype(bf), w1.astype(bf)).astype(bf)
    h_m = jnp.maximum(dot32(a_bf, xw1_m) + b1, 0.0)
    hw2_m = dot32(h_m.astype(bf), w2.astype(bf)).astype(bf)
    z_m = dot32(a_bf, hw2_m) + b2
    ref_matched = jax.nn.log_softmax(z_m, axis=1)
    assert jnp.allclose(out, ref_matched, atol=5e-3, rtol=5e-3)
    assert jnp.allclose(out_tiled, ref_matched, atol=5e-3, rtol=5e-3)

    # Reference 2: full-f32 module semantics (looser tolerance for bf16 streaming).
    h_ref = jnp.maximum(a_hat @ (x @ w1) + b1, 0.0)
    z_ref = a_hat @ (h_ref @ w2) + b2
    ref_f32 = jax.nn.log_softmax(z_ref, axis=1)
    assert jnp.allclose(out, ref_f32, atol=8e-2, rtol=8e-2)
    assert jnp.allclose(out_tiled, ref_f32, atol=8e-2, rtol=8e-2)

    print("KERNEL_OK")
</pallas_src>

<mosaic_0001>
module attributes {stable_mosaic.version = 11 : i64} {
  func.func @_fused_kernel(%arg0: memref<128x128xbf16, #tpu.memory_space<vmem>>, %arg1: memref<128x128xbf16, #tpu.memory_space<vmem>>, %arg2: memref<128x128xbf16, #tpu.memory_space<vmem>>, %arg3: memref<1x128xf32, #tpu.memory_space<vmem>>, %arg4: memref<128x128xbf16, #tpu.memory_space<vmem>>, %arg5: memref<1x128xf32, #tpu.memory_space<vmem>>, %arg6: memref<128x128xf32, #tpu.memory_space<vmem>>) attributes {dimension_semantics = [], scalar_prefetch = 0 : i64, scratch_operands = 0 : i64, tpu.core_type = #tpu.core_type<tc>} {
    %c0 = arith.constant 0 : index
    %c0_0 = arith.constant 0 : index
    %0 = vector.load %arg1[%c0, %c0_0] : memref<128x128xbf16, #tpu.memory_space<vmem>>, vector<128x128xbf16>
    %c0_1 = arith.constant 0 : index
    %c0_2 = arith.constant 0 : index
    %1 = vector.load %arg2[%c0_1, %c0_2] : memref<128x128xbf16, #tpu.memory_space<vmem>>, vector<128x128xbf16>
    %cst = arith.constant dense<0.000000e+00> : vector<128x128xf32>
    %2 = tpu.matmul %0, %1, %cst {dimension_numbers = #tpu.dot_dimension_numbers<[1], [0], [0], [1], [0, 0, 1, 1], [], []>} : vector<128x128xbf16>, vector<128x128xbf16>, vector<128x128xf32> -> vector<128x128xf32>
    %c0_3 = arith.constant 0 : index
    %c0_4 = arith.constant 0 : index
    %3 = vector.load %arg0[%c0_3, %c0_4] : memref<128x128xbf16, #tpu.memory_space<vmem>>, vector<128x128xbf16>
    %4 = arith.truncf %2 : vector<128x128xf32> to vector<128x128xbf16>
    %cst_5 = arith.constant dense<0.000000e+00> : vector<128x128xf32>
    %5 = tpu.matmul %3, %4, %cst_5 {dimension_numbers = #tpu.dot_dimension_numbers<[1], [0], [0], [1], [0, 0, 1, 1], [], []>} : vector<128x128xbf16>, vector<128x128xbf16>, vector<128x128xf32> -> vector<128x128xf32>
    %c0_6 = arith.constant 0 : index
    %c0_7 = arith.constant 0 : index
    %6 = vector.load %arg3[%c0_6, %c0_7] : memref<1x128xf32, #tpu.memory_space<vmem>>, vector<1x128xf32>
    %7 = vector.broadcast %6 : vector<1x128xf32> to vector<128x128xf32>
    %8 = arith.addf %5, %7 : vector<128x128xf32>
    %cst_8 = arith.constant 0.000000e+00 : f32
    %9 = vector.broadcast %cst_8 : f32 to vector<128x128xf32>
    %10 = arith.maximumf %8, %9 : vector<128x128xf32>
    %11 = arith.truncf %10 : vector<128x128xf32> to vector<128x128xbf16>
    %c0_9 = arith.constant 0 : index
    %c0_10 = arith.constant 0 : index
    %12 = vector.load %arg4[%c0_9, %c0_10] : memref<128x128xbf16, #tpu.memory_space<vmem>>, vector<128x128xbf16>
    %cst_11 = arith.constant dense<0.000000e+00> : vector<128x128xf32>
    %13 = tpu.matmul %11, %12, %cst_11 {dimension_numbers = #tpu.dot_dimension_numbers<[1], [0], [0], [1], [0, 0, 1, 1], [], []>} : vector<128x128xbf16>, vector<128x128xbf16>, vector<128x128xf32> -> vector<128x128xf32>
    %c0_12 = arith.constant 0 : index
    %c0_13 = arith.constant 0 : index
    %14 = vector.load %arg0[%c0_12, %c0_13] : memref<128x128xbf16, #tpu.memory_space<vmem>>, vector<128x128xbf16>
    %15 = arith.truncf %13 : vector<128x128xf32> to vector<128x128xbf16>
    %cst_14 = arith.constant dense<0.000000e+00> : vector<128x128xf32>
    %16 = tpu.matmul %14, %15, %cst_14 {dimension_numbers = #tpu.dot_dimension_numbers<[1], [0], [0], [1], [0, 0, 1, 1], [], []>} : vector<128x128xbf16>, vector<128x128xbf16>, vector<128x128xf32> -> vector<128x128xf32>
    %c0_15 = arith.constant 0 : index
    %c0_16 = arith.constant 0 : index
    %17 = vector.load %arg5[%c0_15, %c0_16] : memref<1x128xf32, #tpu.memory_space<vmem>>, vector<1x128xf32>
    %18 = vector.broadcast %17 : vector<1x128xf32> to vector<128x128xf32>
    %19 = arith.addf %16, %18 : vector<128x128xf32>
    %20 = tpu.iota {dimensions = array<i32: 1>} : vector<128x128xi32>
    %c8_i32 = arith.constant 8 : i32
    %21 = vector.broadcast %c8_i32 : i32 to vector<128x128xi32>
    %22 = arith.cmpi slt, %20, %21 : vector<128x128xi32>
    %cst_17 = arith.constant -1.000000e+30 : f32
    %23 = vector.broadcast %cst_17 : f32 to vector<128x128xf32>
    %24 = arith.select %22, %19, %23 : vector<128x128xi1>, vector<128x128xf32>
    %cst_18 = arith.constant dense<0xFF800000> : vector<128xf32>
    %25 = vector.multi_reduction <maximumf>, %24, %cst_18 [1] : vector<128x128xf32> to vector<128xf32>
    %26 = vector.shape_cast %25 : vector<128xf32> to vector<128x1xf32>
    %27 = vector.broadcast %26 : vector<128x1xf32> to vector<128x128xf32>
    %28 = arith.subf %24, %27 : vector<128x128xf32>
    %29 = math.exp %28 : vector<128x128xf32>
    %cst_19 = arith.constant dense<0.000000e+00> : vector<128xf32>
    %30 = vector.multi_reduction <add>, %29, %cst_19 [1] : vector<128x128xf32> to vector<128xf32>
    %31 = vector.shape_cast %30 : vector<128xf32> to vector<128x1xf32>
    %32 = math.log %31 : vector<128x1xf32>
    %33 = vector.broadcast %32 : vector<128x1xf32> to vector<128x128xf32>
    %34 = arith.subf %28, %33 : vector<128x128xf32>
    %c0_20 = arith.constant 0 : index
    %c0_21 = arith.constant 0 : index
    %35 = vector.load %arg6[%c0_20, %c0_21] : memref<128x128xf32, #tpu.memory_space<vmem>>, vector<128x128xf32>
    tpu.vector_store %arg6[%c0_20, %c0_21], %34 {strides = array<i32>} : memref<128x128xf32, #tpu.memory_space<vmem>>, vector<128x128xf32>,
    return
  }
}

</mosaic_0001>

<llo_original>
// kernel: tpu_custom_call.1
$region0: #{tpu_custom_call.1}
  #allocation0 [shape = 'u32[]', space=smem, size = 0x4, offset = 0x4, fixed_abs, tag = 'smem constant byte address 0x4 - core index']
  #allocation1 [shape = 'u32[144,128]{1,0:T(1,128)}', space=vmem, size = 0x12000, scoped, tag = 'internal scratch']
  %s0 = inlined_call_operand.hbm [shape: bf16[128,128], index: 0, kind: input, shape index: {}]
  %s1 = inlined_call_operand.hbm [shape: bf16[128,128], index: 1, kind: input, shape index: {}]
  %s2 = inlined_call_operand.hbm [shape: bf16[128,128], index: 2, kind: input, shape index: {}]
  %s3 = inlined_call_operand.vmem [shape: f32[1,128], index: 3, kind: input, shape index: {}]
  %s4 = inlined_call_operand.hbm [shape: bf16[128,128], index: 4, kind: input, shape index: {}]
  %s5 = inlined_call_operand.vmem [shape: f32[1,128], index: 5, kind: input, shape index: {}]
  %s6 = inlined_call_operand.hbm [shape: f32[128,128], index: 6, kind: output, shape index: {}]
  %s7 = sld [smem:[#allocation0]]
  $region50: #{tpu_custom_call.1} parent=0
    _
  %s9 = ssub.s32 1, %s7
  %s10 = scalar_select 0, %s9, %s7
  $region1: #{tpu_custom_call.1} parent=0
    #allocation2 [shape = 'u8[32768]{0}', space=vmem, size = 0x8000, scoped, tag = 'input window, operand 0, single buffered']
    #allocation3 [shape = 's32[1]{0}', space=sflag, size = 0x4, scoped, tag = 'scoped memory for tpu_custom_call.1']
    #allocation4 [shape = 's32[1]{0}', space=sflag, size = 0x4, scoped, tag = 'scoped memory for tpu_custom_call.1']
    #allocation5 [shape = 'u8[32768]{0}', space=vmem, size = 0x8000, scoped, tag = 'input window, operand 1, single buffered']
    #allocation6 [shape = 's32[1]{0}', space=sflag, size = 0x4, scoped, tag = 'scoped memory for tpu_custom_call.1']
    #allocation7 [shape = 'u8[32768]{0}', space=vmem, size = 0x8000, scoped, tag = 'input window, operand 2, single buffered']
    #allocation8 [shape = 'u8[32768]{0}', space=vmem, size = 0x8000, scoped, tag = 'input window, operand 4, single buffered']
    #allocation9 [shape = 's32[1]{0}', space=sflag, size = 0x4, scoped, tag = 'scoped memory for tpu_custom_call.1']
    #allocation10 [shape = 'u8[65536]{0}', space=vmem, size = 0x10000, scoped, tag = 'output window, operand 0, single buffered']
    %11 = vsyncpa [#allocation3], 0
    %12 = vsyncpa [#allocation6], 0
    %13 = vsyncpa [#allocation9], 0
    %14 = vsyncpa [#allocation4], 0
    // Predicated region
    $region2: #{tpu_custom_call.1} parent=1 // pred_check
      _
    $region3: #{tpu_custom_call.1} parent=1 // pred_check_branch
      %16 = sbr.rel (0) target = $region5
    $region4: #{tpu_custom_call.1} parent=1 // pred_region
      %s18 = ssub.s32 1024, 1024
      %19 = vsyncadd [#allocation3], %s18
      %s20 = sshll.u32 [#allocation2], 4
      %s21 = int_to_ptr.vmem [resolvable:$true] %s20
      %26 = dma.hbm_to_vmem [thread:$0]  %s0, 1024, %s21, [#allocation3], 64, 64, 4
    $region5: #{tpu_custom_call.1} parent=1 // pred_fallthru
      _
    // Predicated region
    $region6: #{tpu_custom_call.1} parent=1 // pred_check
      _
    $region7: #{tpu_custom_call.1} parent=1 // pred_check_branch
      %28 = sbr.rel (0) target = $region9
    $region8: #{tpu_custom_call.1} parent=1 // pred_region
      %s30 = ssub.s32 1024, 1024
      %31 = vsyncadd [#allocation6], %s30
      %s32 = sshll.u32 [#allocation5], 4
      %s33 = int_to_ptr.vmem [resolvable:$true] %s32
      %38 = dma.hbm_to_vmem [thread:$0]  %s1, 1024, %s33, [#allocation6], 64, 64, 4
    $region9: #{tpu_custom_call.1} parent=1 // pred_fallthru
      _
    // Predicated region
    $region10: #{tpu_custom_call.1} parent=1 // pred_check
      _
    $region11: #{tpu_custom_call.1} parent=1 // pred_check_branch
      %40 = sbr.rel (0) target = $region13
    $region12: #{tpu_custom_call.1} parent=1 // pred_region
      %s42 = ssub.s32 1024, 1024
      %43 = vsyncadd [#allocation6], %s42
      %s44 = sshll.u32 [#allocation7], 4
      %s45 = int_to_ptr.vmem [resolvable:$true] %s44
      %50 = dma.hbm_to_vmem [thread:$0]  %s2, 1024, %s45, [#allocation6], 64, 64, 4
    $region13: #{tpu_custom_call.1} parent=1 // pred_fallthru
      _
    // Predicated region
    $region14: #{tpu_custom_call.1} parent=1 // pred_check
      _
    $region15: #{tpu_custom_call.1} parent=1 // pred_check_branch
      %52 = sbr.rel (0) target = $region17
    $region16: #{tpu_custom_call.1} parent=1 // pred_region
      _
    $region17: #{tpu_custom_call.1} parent=1 // pred_fallthru
      _
    // Predicated region
    $region18: #{tpu_custom_call.1} parent=1 // pred_check
      _
    $region19: #{tpu_custom_call.1} parent=1 // pred_check_branch
      %54 = sbr.rel (0) target = $region21
    $region20: #{tpu_custom_call.1} parent=1 // pred_region
      %s56 = ssub.s32 1024, 1024
      %57 = vsyncadd [#allocation9], %s56
      %s58 = sshll.u32 [#allocation8], 4
      %s59 = int_to_ptr.vmem [resolvable:$true] %s58
      %64 = dma.hbm_to_vmem [thread:$0]  %s4, 1024, %s59, [#allocation9], 64, 64, 4
    $region21: #{tpu_custom_call.1} parent=1 // pred_fallthru
      _
    // Predicated region
    $region22: #{tpu_custom_call.1} parent=1 // pred_check
      _
    $region23: #{tpu_custom_call.1} parent=1 // pred_check_branch
      %66 = sbr.rel (0) target = $region25
    $region24: #{tpu_custom_call.1} parent=1 // pred_region
      _
    $region25: #{tpu_custom_call.1} parent=1 // pred_fallthru
      _
    // Predicated region
    $region26: #{tpu_custom_call.1} parent=1 // pred_check
      _
    $region27: #{tpu_custom_call.1} parent=1 // pred_check_branch
      %68 = sbr.rel (0) target = $region29
    $region28: #{tpu_custom_call.1} parent=1 // pred_region
      %69 = dma.done [#allocation3], 1024
    $region29: #{tpu_custom_call.1} parent=1 // pred_fallthru
      _
    // Predicated region
    $region30: #{tpu_custom_call.1} parent=1 // pred_check
      _
    $region31: #{tpu_custom_call.1} parent=1 // pred_check_branch
      %71 = sbr.rel (0) target = $region33
    $region32: #{tpu_custom_call.1} parent=1 // pred_region
      %72 = dma.done [#allocation6], 1024
    $region33: #{tpu_custom_call.1} parent=1 // pred_fallthru
      _
    // Predicated region
    $region34: #{tpu_custom_call.1} parent=1 // pred_check
      _
    $region35: #{tpu_custom_call.1} parent=1 // pred_check_branch
      %74 = sbr.rel (0) target = $region37
    $region36: #{tpu_custom_call.1} parent=1 // pred_region
      %75 = dma.done [#allocation6], 1024
    $region37: #{tpu_custom_call.1} parent=1 // pred_fallthru
      _
    // Predicated region
    $region38: #{tpu_custom_call.1} parent=1 // pred_check
      _
    $region39: #{tpu_custom_call.1} parent=1 // pred_check_branch
      %77 = sbr.rel (0) target = $region41
    $region40: #{tpu_custom_call.1} parent=1 // pred_region
      %78 = dma.done [#allocation9], 1024
    $region41: #{tpu_custom_call.1} parent=1 // pred_fallthru
      _
    %v80 = vld [vmem:[#allocation5] sm:$0xf]
    %v81 = vld [vmem:[#allocation5 + $0x4] sm:$0xf]
    %v82 = vld [vmem:[#allocation5 + $0x8] sm:$0xf]
    %v83 = vld [vmem:[#allocation5 + $0xc] sm:$0xf]
    %v84 = vld [vmem:[#allocation5 + $0x10] sm:$0xf]
    %v85 = vld [vmem:[#allocation5 + $0x14] sm:$0xf]
    %v86 = vld [vmem:[#allocation5 + $0x18] sm:$0xf]
    %v87 = vld [vmem:[#allocation5 + $0x1c] sm:$0xf]
    %v88 = vld [vmem:[#allocation5 + $0x20] sm:$0xf]
    %v89 = vld [vmem:[#allocation5 + $0x24] sm:$0xf]
    %v90 = vld [vmem:[#allocation5 + $0x28] sm:$0xf]
    %v91 = vld [vmem:[#allocation5 + $0x2c] sm:$0xf]
    %v92 = vld [vmem:[#allocation5 + $0x30] sm:$0xf]
    %v93 = vld [vmem:[#allocation5 + $0x34] sm:$0xf]
    %v94 = vld [vmem:[#allocation5 + $0x38] sm:$0xf]
    %v95 = vld [vmem:[#allocation5 + $0x3c] sm:$0xf]
    %v96 = vld [vmem:[#allocation7] sm:$0xf]
    %v97 = vld [vmem:[#allocation7 + $0x4] sm:$0xf]
    %v98 = vld [vmem:[#allocation7 + $0x8] sm:$0xf]
    %v99 = vld [vmem:[#allocation7 + $0xc] sm:$0xf]
    %v100 = vld [vmem:[#allocation7 + $0x10] sm:$0xf]
    %v101 = vld [vmem:[#allocation7 + $0x14] sm:$0xf]
    %v102 = vld [vmem:[#allocation7 + $0x18] sm:$0xf]
    %v103 = vld [vmem:[#allocation7 + $0x1c] sm:$0xf]
    %v104 = vld [vmem:[#allocation7 + $0x20] sm:$0xf]
    %v105 = vld [vmem:[#allocation7 + $0x24] sm:$0xf]
    %v106 = vld [vmem:[#allocation7 + $0x28] sm:$0xf]
    %v107 = vld [vmem:[#allocation7 + $0x2c] sm:$0xf]
    %v108 = vld [vmem:[#allocation7 + $0x30] sm:$0xf]
    %v109 = vld [vmem:[#allocation7 + $0x34] sm:$0xf]
    %v110 = vld [vmem:[#allocation7 + $0x38] sm:$0xf]
    %v111 = vld [vmem:[#allocation7 + $0x3c] sm:$0xf]
    %v128 = vunpack.c.l.b16 %v80
    %v129 = vunpack.c.l.b16 %v81
    %v130 = vunpack.c.l.b16 %v82
    %v131 = vunpack.c.l.b16 %v83
    %v132 = vunpack.c.l.b16 %v84
    %v133 = vunpack.c.l.b16 %v85
    %v134 = vunpack.c.l.b16 %v86
    %v135 = vunpack.c.l.b16 %v87
    %v136 = vunpack.c.l.b16 %v88
    %v137 = vunpack.c.l.b16 %v89
    %v138 = vunpack.c.l.b16 %v90
    %v139 = vunpack.c.l.b16 %v91
    %v140 = vunpack.c.l.b16 %v92
    %v141 = vunpack.c.l.b16 %v93
    %v142 = vunpack.c.l.b16 %v94
    %v143 = vunpack.c.l.b16 %v95
    %v144 = vpack.c.b16 %v129, %v128
    %v145 = vpack.c.b16 %v131, %v130
    %v146 = vpack.c.b16 %v133, %v132
    %v147 = vpack.c.b16 %v135, %v134
    %v148 = vpack.c.b16 %v137, %v136
    %v149 = vpack.c.b16 %v139, %v138
    %v150 = vpack.c.b16 %v141, %v140
    %v151 = vpack.c.b16 %v143, %v142
    %v176 = vunpack.c.l.b16 %v96
    %v177 = vunpack.c.l.b16 %v97
    %v178 = vunpack.c.l.b16 %v98
    %v179 = vunpack.c.l.b16 %v99
    %v180 = vunpack.c.l.b16 %v100
    %v181 = vunpack.c.l.b16 %v101
    %v182 = vunpack.c.l.b16 %v102
    %v183 = vunpack.c.l.b16 %v103
    %v184 = vunpack.c.l.b16 %v104
    %v185 = vunpack.c.l.b16 %v105
    %v186 = vunpack.c.l.b16 %v106
    %v187 = vunpack.c.l.b16 %v107
    %v188 = vunpack.c.l.b16 %v108
    %v189 = vunpack.c.l.b16 %v109
    %v190 = vunpack.c.l.b16 %v110
    %v191 = vunpack.c.l.b16 %v111
    %v192 = vpack.c.b16 %v177, %v176
    %v193 = vpack.c.b16 %v179, %v178
    %v194 = vpack.c.b16 %v181, %v180
    %v195 = vpack.c.b16 %v183, %v182
    %v196 = vpack.c.b16 %v185, %v184
    %v197 = vpack.c.b16 %v187, %v186
    %v198 = vpack.c.b16 %v189, %v188
    %v199 = vpack.c.b16 %v191, %v190
    %208 = vmatprep.subr.bf16.mxu0 0
    %209 = vmatpush1.bf16.msra.mxu0 %v199
    %210 = vmatprep.subr.bf16.mxu0 0
    %211 = vmatpush1.bf16.msra.mxu0 %v198
    %212 = vmatprep.subr.bf16.mxu0 0
    %213 = vmatpush1.bf16.msra.mxu0 %v197
    %214 = vmatprep.subr.bf16.mxu0 0
    %215 = vmatpush1.bf16.msra.mxu0 %v196
    %216 = vmatprep.subr.bf16.mxu0 0
    %217 = vmatpush1.bf16.msra.mxu0 %v195
    %218 = vmatprep.subr.bf16.mxu0 0
    %219 = vmatpush1.bf16.msra.mxu0 %v194
    %220 = vmatprep.subr.bf16.mxu0 0
    %221 = vmatpush1.bf16.msra.mxu0 %v193
    %222 = vmatprep.subr.bf16.mxu0 0
    %223 = vmatpush1.bf16.msra.mxu0 %v192
    %224 = vmatprep.subr.bf16.mxu0 0
    %225 = vmatpush2.bf16.msra.mxu0 0
    %226 = vmatprep.subr.bf16.mxu0 0
    %227 = vmatpush2.bf16.msra.mxu0 0
    %228 = vmatprep.subr.bf16.mxu0 0
    %229 = vmatpush2.bf16.msra.mxu0 0
    %230 = vmatprep.subr.bf16.mxu0 0
    %231 = vmatpush2.bf16.msra.mxu0 0
    %232 = vmatprep.subr.bf16.mxu0 0
    %233 = vmatpush2.bf16.msra.mxu0 0
    %234 = vmatprep.subr.bf16.mxu0 0
    %235 = vmatpush2.bf16.msra.mxu0 0
    %236 = vmatprep.subr.bf16.mxu0 0
    %237 = vmatpush2.bf16.msra.mxu0 0
    %238 = vmatprep.subr.bf16.mxu0 0
    %239 = vmatpush2.bf16.msra.mxu0 0
    %240 = vmatprep.mubr.bf16.mxu0 0
    %241 = vmatmul.mubr.bf16.gmra.mxu0 %v144
    %v242 = vpop.f32.mrf.mxu0
    %v243 = vadd.f32 0.0, %v242
    %v244 = vpop.f32.mrf.mxu0
    %v245 = vpop.f32.mrf.mxu0
    %v246 = vadd.f32 0.0, %v245
    %v247 = vpop.f32.mrf.mxu0
    %248 = vmatprep.mubr.bf16.mxu0 0
    %249 = vmatmul.mubr.bf16.gmra.mxu0 %v145
    %v250 = vpop.f32.mrf.mxu0
    %v251 = vadd.f32 0.0, %v250
    %v252 = vpop.f32.mrf.mxu0
    %v253 = vpop.f32.mrf.mxu0
    %v254 = vadd.f32 0.0, %v253
    %v255 = vpop.f32.mrf.mxu0
    %256 = vmatprep.mubr.bf16.mxu0 0
    %257 = vmatmul.mubr.bf16.gmra.mxu0 %v146
    %v258 = vpop.f32.mrf.mxu0
    %v259 = vadd.f32 0.0, %v258
    %v260 = vpop.f32.mrf.mxu0
    %v261 = vpop.f32.mrf.mxu0
    %v262 = vadd.f32 0.0, %v261
    %v263 = vpop.f32.mrf.mxu0
    %264 = vmatprep.mubr.bf16.mxu0 0
    %265 = vmatmul.mubr.bf16.gmra.mxu0 %v147
    %v266 = vpop.f32.mrf.mxu0
    %v267 = vadd.f32 0.0, %v266
    %v268 = vpop.f32.mrf.mxu0
    %v269 = vpop.f32.mrf.mxu0
    %v270 = vadd.f32 0.0, %v269
    %v271 = vpop.f32.mrf.mxu0
    %272 = vmatprep.mubr.bf16.mxu0 0
    %273 = vmatmul.mubr.bf16.gmra.mxu0 %v148
    %v274 = vpop.f32.mrf.mxu0
    %v275 = vadd.f32 0.0, %v274
    %v276 = vpop.f32.mrf.mxu0
    %v277 = vpop.f32.mrf.mxu0
    %v278 = vadd.f32 0.0, %v277
    %v279 = vpop.f32.mrf.mxu0
    %280 = vmatprep.mubr.bf16.mxu0 0
    %281 = vmatmul.mubr.bf16.gmra.mxu0 %v149
    %v282 = vpop.f32.mrf.mxu0
    %v283 = vadd.f32 0.0, %v282
    %v284 = vpop.f32.mrf.mxu0
    %v285 = vpop.f32.mrf.mxu0
    %v286 = vadd.f32 0.0, %v285
    %v287 = vpop.f32.mrf.mxu0
    %288 = vmatprep.mubr.bf16.mxu0 0
    %289 = vmatmul.mubr.bf16.gmra.mxu0 %v150
    %v290 = vpop.f32.mrf.mxu0
    %v291 = vadd.f32 0.0, %v290
    %v292 = vpop.f32.mrf.mxu0
    %v293 = vpop.f32.mrf.mxu0
    %v294 = vadd.f32 0.0, %v293
    %v295 = vpop.f32.mrf.mxu0
    %296 = vmatprep.mubr.bf16.mxu0 0
    %297 = vmatmul.mubr.bf16.gmra.mxu0 %v151
    %v298 = vpop.f32.mrf.mxu0
    %v299 = vadd.f32 0.0, %v298
    %v300 = vpop.f32.mrf.mxu0
    %v301 = vpop.f32.mrf.mxu0
    %v302 = vadd.f32 0.0, %v301
    %v303 = vpop.f32.mrf.mxu0
    %304 = vdwg.mxu0
    %v305 = vld [vmem:[#allocation2] sm:$0xf]
    %v306 = vld [vmem:[#allocation2 + $0x4] sm:$0xf]
    %v307 = vld [vmem:[#allocation2 + $0x8] sm:$0xf]
    %v308 = vld [vmem:[#allocation2 + $0xc] sm:$0xf]
    %v309 = vld [vmem:[#allocation2 + $0x10] sm:$0xf]
    %v310 = vld [vmem:[#allocation2 + $0x14] sm:$0xf]
    %v311 = vld [vmem:[#allocation2 + $0x18] sm:$0xf]
    %v312 = vld [vmem:[#allocation2 + $0x1c] sm:$0xf]
    %v313 = vld [vmem:[#allocation2 + $0x20] sm:$0xf]
    %v314 = vld [vmem:[#allocation2 + $0x24] sm:$0xf]
    %v315 = vld [vmem:[#allocation2 + $0x28] sm:$0xf]
    %v316 = vld [vmem:[#allocation2 + $0x2c] sm:$0xf]
    %v317 = vld [vmem:[#allocation2 + $0x30] sm:$0xf]
    %v318 = vld [vmem:[#allocation2 + $0x34] sm:$0xf]
    %v319 = vld [vmem:[#allocation2 + $0x38] sm:$0xf]
    %v320 = vld [vmem:[#allocation2 + $0x3c] sm:$0xf]
    %v321 = vpack.c.bf16 %v246, %v243
    %v322 = vpack.c.bf16 %v254, %v251
    %v323 = vpack.c.bf16 %v262, %v259
    %v324 = vpack.c.bf16 %v270, %v267
    %v325 = vpack.c.bf16 %v278, %v275
    %v326 = vpack.c.bf16 %v286, %v283
    %v327 = vpack.c.bf16 %v294, %v291
    %v328 = vpack.c.bf16 %v302, %v299
    %v329 = vld [vmem:[%s3] sm:$0x1]
    %v331 = vlaneseq
    %v332 = vshrl.u32 %v331, 7
    %v333 = vsub.s32 0, %v332
    %v334 = vrot.slane %v329, %v333
    %v352 = vunpack.c.l.b16 %v305
    %v353 = vunpack.c.l.b16 %v306
    %v354 = vunpack.c.l.b16 %v307
    %v355 = vunpack.c.l.b16 %v308
    %v356 = vunpack.c.l.b16 %v309
    %v357 = vunpack.c.l.b16 %v310
    %v358 = vunpack.c.l.b16 %v311
    %v359 = vunpack.c.l.b16 %v312
    %v360 = vunpack.c.l.b16 %v313
    %v361 = vunpack.c.l.b16 %v314
    %v362 = vunpack.c.l.b16 %v315
    %v363 = vunpack.c.l.b16 %v316
    %v364 = vunpack.c.l.b16 %v317
    %v365 = vunpack.c.l.b16 %v318
    %v366 = vunpack.c.l.b16 %v319
    %v367 = vunpack.c.l.b16 %v320
    %v368 = vpack.c.b16 %v353, %v352
    %v369 = vpack.c.b16 %v355, %v354
    %v370 = vpack.c.b16 %v357, %v356
    %v371 = vpack.c.b16 %v359, %v358
    %v372 = vpack.c.b16 %v361, %v360
    %v373 = vpack.c.b16 %v363, %v362
    %v374 = vpack.c.b16 %v365, %v364
    %v375 = vpack.c.b16 %v367, %v366
    %384 = vmatprep.subr.bf16.mxu0 0
    %385 = vmatpush1.bf16.msra.mxu0 %v328
    %386 = vmatprep.subr.bf16.mxu0 0
    %387 = vmatpush1.bf16.msra.mxu0 %v327
    %388 = vmatprep.subr.bf16.mxu0 0
    %389 = vmatpush1.bf16.msra.mxu0 %v326
    %390 = vmatprep.subr.bf16.mxu0 0
    %391 = vmatpush1.bf16.msra.mxu0 %v325
    %392 = vmatprep.subr.bf16.mxu0 0
    %393 = vmatpush1.bf16.msra.mxu0 %v324
    %394 = vmatprep.subr.bf16.mxu0 0
    %395 = vmatpush1.bf16.msra.mxu0 %v323
    %396 = vmatprep.subr.bf16.mxu0 0
    %397 = vmatpush1.bf16.msra.mxu0 %v322
    %398 = vmatprep.subr.bf16.mxu0 0
    %399 = vmatpush1.bf16.msra.mxu0 %v321
    %400 = vmatprep.subr.bf16.mxu0 0
    %401 = vmatpush2.bf16.msra.mxu0 0
    %402 = vmatprep.subr.bf16.mxu0 0
    %403 = vmatpush2.bf16.msra.mxu0 0
    %404 = vmatprep.subr.bf16.mxu0 0
    %405 = vmatpush2.bf16.msra.mxu0 0
    %406 = vmatprep.subr.bf16.mxu0 0
    %407 = vmatpush2.bf16.msra.mxu0 0
    %408 = vmatprep.subr.bf16.mxu0 0
    %409 = vmatpush2.bf16.msra.mxu0 0
    %410 = vmatprep.subr.bf16.mxu0 0
    %411 = vmatpush2.bf16.msra.mxu0 0
    %412 = vmatprep.subr.bf16.mxu0 0
    %413 = vmatpush2.bf16.msra.mxu0 0
    %414 = vmatprep.subr.bf16.mxu0 0
    %415 = vmatpush2.bf16.msra.mxu0 0
    %416 = vmatprep.mubr.bf16.mxu0 0
    %417 = vmatmul.mubr.bf16.gmra.mxu0 %v368
    %v418 = vpop.f32.mrf.mxu0
    %v419 = vadd.f32 %v334, %v418
    %v420 = vpop.f32.mrf.mxu0
    %v421 = vpop.f32.mrf.mxu0
    %v422 = vadd.f32 %v334, %v421
    %v423 = vpop.f32.mrf.mxu0
    %424 = vmatprep.mubr.bf16.mxu0 0
    %425 = vmatmul.mubr.bf16.gmra.mxu0 %v369
    %v426 = vpop.f32.mrf.mxu0
    %v427 = vadd.f32 %v334, %v426
    %v428 = vpop.f32.mrf.mxu0
    %v429 = vpop.f32.mrf.mxu0
    %v430 = vadd.f32 %v334, %v429
    %v431 = vpop.f32.mrf.mxu0
    %432 = vmatprep.mubr.bf16.mxu0 0
    %433 = vmatmul.mubr.bf16.gmra.mxu0 %v370
    %v434 = vpop.f32.mrf.mxu0
    %v435 = vadd.f32 %v334, %v434
    %v436 = vpop.f32.mrf.mxu0
    %v437 = vpop.f32.mrf.mxu0
    %v438 = vadd.f32 %v334, %v437
    %v439 = vpop.f32.mrf.mxu0
    %440 = vmatprep.mubr.bf16.mxu0 0
    %441 = vmatmul.mubr.bf16.gmra.mxu0 %v371
    %v442 = vpop.f32.mrf.mxu0
    %v443 = vadd.f32 %v334, %v442
    %v444 = vpop.f32.mrf.mxu0
    %v445 = vpop.f32.mrf.mxu0
    %v446 = vadd.f32 %v334, %v445
    %v447 = vpop.f32.mrf.mxu0
    %448 = vmatprep.mubr.bf16.mxu0 0
    %449 = vmatmul.mubr.bf16.gmra.mxu0 %v372
    %v450 = vpop.f32.mrf.mxu0
    %v451 = vadd.f32 %v334, %v450
    %v452 = vpop.f32.mrf.mxu0
    %v453 = vpop.f32.mrf.mxu0
    %v454 = vadd.f32 %v334, %v453
    %v455 = vpop.f32.mrf.mxu0
    %456 = vmatprep.mubr.bf16.mxu0 0
    %457 = vmatmul.mubr.bf16.gmra.mxu0 %v373
    %v458 = vpop.f32.mrf.mxu0
    %v459 = vadd.f32 %v334, %v458
    %v460 = vpop.f32.mrf.mxu0
    %v461 = vpop.f32.mrf.mxu0
    %v462 = vadd.f32 %v334, %v461
    %v463 = vpop.f32.mrf.mxu0
    %464 = vmatprep.mubr.bf16.mxu0 0
    %465 = vmatmul.mubr.bf16.gmra.mxu0 %v374
    %v466 = vpop.f32.mrf.mxu0
    %v467 = vadd.f32 %v334, %v466
    %v468 = vpop.f32.mrf.mxu0
    %v469 = vpop.f32.mrf.mxu0
    %v470 = vadd.f32 %v334, %v469
    %v471 = vpop.f32.mrf.mxu0
    %472 = vmatprep.mubr.bf16.mxu0 0
    %473 = vmatmul.mubr.bf16.gmra.mxu0 %v375
    %v474 = vpop.f32.mrf.mxu0
    %v475 = vadd.f32 %v334, %v474
    %v476 = vpop.f32.mrf.mxu0
    %v477 = vpop.f32.mrf.mxu0
    %v478 = vadd.f32 %v334, %v477
    %v479 = vpop.f32.mrf.mxu0
    %480 = vdwg.mxu0
    %v481 = vmax.f32 %v419, 0.0
    %v482 = vmax.f32 %v422, 0.0
    %v483 = vmax.f32 %v427, 0.0
    %v484 = vmax.f32 %v430, 0.0
    %v485 = vmax.f32 %v435, 0.0
    %v486 = vmax.f32 %v438, 0.0
    %v487 = vmax.f32 %v443, 0.0
    %v488 = vmax.f32 %v446, 0.0
    %v489 = vmax.f32 %v451, 0.0
    %v490 = vmax.f32 %v454, 0.0
    %v491 = vmax.f32 %v459, 0.0
    %v492 = vmax.f32 %v462, 0.0
    %v493 = vmax.f32 %v467, 0.0
    %v494 = vmax.f32 %v470, 0.0
    %v495 = vmax.f32 %v475, 0.0
    %v496 = vmax.f32 %v478, 0.0
    %v497 = vpack.c.bf16 %v482, %v481
    %v498 = vpack.c.bf16 %v484, %v483
    %v499 = vpack.c.bf16 %v486, %v485
    %v500 = vpack.c.bf16 %v488, %v487
    %v501 = vpack.c.bf16 %v490, %v489
    %v502 = vpack.c.bf16 %v492, %v491
    %v503 = vpack.c.bf16 %v494, %v493
    %v504 = vpack.c.bf16 %v496, %v495
    %v505 = vld [vmem:[#allocation8] sm:$0xf]
    %v506 = vld [vmem:[#allocation8 + $0x4] sm:$0xf]
    %v507 = vld [vmem:[#allocation8 + $0x8] sm:$0xf]
    %v508 = vld [vmem:[#allocation8 + $0xc] sm:$0xf]
    %v509 = vld [vmem:[#allocation8 + $0x10] sm:$0xf]
    %v510 = vld [vmem:[#allocation8 + $0x14] sm:$0xf]
    %v511 = vld [vmem:[#allocation8 + $0x18] sm:$0xf]
    %v512 = vld [vmem:[#allocation8 + $0x1c] sm:$0xf]
    %v513 = vld [vmem:[#allocation8 + $0x20] sm:$0xf]
    %v514 = vld [vmem:[#allocation8 + $0x24] sm:$0xf]
    %v515 = vld [vmem:[#allocation8 + $0x28] sm:$0xf]
    %v516 = vld [vmem:[#allocation8 + $0x2c] sm:$0xf]
    %v517 = vld [vmem:[#allocation8 + $0x30] sm:$0xf]
    %v518 = vld [vmem:[#allocation8 + $0x34] sm:$0xf]
    %v519 = vld [vmem:[#allocation8 + $0x38] sm:$0xf]
    %v520 = vld [vmem:[#allocation8 + $0x3c] sm:$0xf]
    %v537 = vunpack.c.l.b16 %v505
    %v538 = vunpack.c.l.b16 %v506
    %v539 = vunpack.c.l.b16 %v507
    %v540 = vunpack.c.l.b16 %v508
    %v541 = vunpack.c.l.b16 %v509
    %v542 = vunpack.c.l.b16 %v510
    %v543 = vunpack.c.l.b16 %v511
    %v544 = vunpack.c.l.b16 %v512
    %v545 = vunpack.c.l.b16 %v513
    %v546 = vunpack.c.l.b16 %v514
    %v547 = vunpack.c.l.b16 %v515
    %v548 = vunpack.c.l.b16 %v516
    %v549 = vunpack.c.l.b16 %v517
    %v550 = vunpack.c.l.b16 %v518
    %v551 = vunpack.c.l.b16 %v519
    %v552 = vunpack.c.l.b16 %v520
    %v553 = vpack.c.b16 %v538, %v537
    %v554 = vpack.c.b16 %v540, %v539
    %v555 = vpack.c.b16 %v542, %v541
    %v556 = vpack.c.b16 %v544, %v543
    %v557 = vpack.c.b16 %v546, %v545
    %v558 = vpack.c.b16 %v548, %v547
    %v559 = vpack.c.b16 %v550, %v549
    %v560 = vpack.c.b16 %v552, %v551
    %569 = vmatprep.subr.bf16.mxu0 0
    %570 = vmatpush1.bf16.msra.mxu0 %v560
    %571 = vmatprep.subr.bf16.mxu0 0
    %572 = vmatpush1.bf16.msra.mxu0 %v559
    %573 = vmatprep.subr.bf16.mxu0 0
    %574 = vmatpush1.bf16.msra.mxu0 %v558
    %575 = vmatprep.subr.bf16.mxu0 0
    %576 = vmatpush1.bf16.msra.mxu0 %v557
    %577 = vmatprep.subr.bf16.mxu0 0
    %578 = vmatpush1.bf16.msra.mxu0 %v556
    %579 = vmatprep.subr.bf16.mxu0 0
    %580 = vmatpush1.bf16.msra.mxu0 %v555
    %581 = vmatprep.subr.bf16.mxu0 0
    %582 = vmatpush1.bf16.msra.mxu0 %v554
    %583 = vmatprep.subr.bf16.mxu0 0
    %584 = vmatpush1.bf16.msra.mxu0 %v553
    %585 = vmatprep.subr.bf16.mxu0 0
    %586 = vmatpush2.bf16.msra.mxu0 0
    %587 = vmatprep.subr.bf16.mxu0 0
    %588 = vmatpush2.bf16.msra.mxu0 0
    %589 = vmatprep.subr.bf16.mxu0 0
    %590 = vmatpush2.bf16.msra.mxu0 0
    %591 = vmatprep.subr.bf16.mxu0 0
    %592 = vmatpush2.bf16.msra.mxu0 0
    %593 = vmatprep.subr.bf16.mxu0 0
    %594 = vmatpush2.bf16.msra.mxu0 0
    %595 = vmatprep.subr.bf16.mxu0 0
    %596 = vmatpush2.bf16.msra.mxu0 0
    %597 = vmatprep.subr.bf16.mxu0 0
    %598 = vmatpush2.bf16.msra.mxu0 0
    %599 = vmatprep.subr.bf16.mxu0 0
    %600 = vmatpush2.bf16.msra.mxu0 0
    %601 = vmatprep.mubr.bf16.mxu0 0
    %602 = vmatmul.mubr.bf16.gmra.mxu0 %v497
    %v603 = vpop.f32.mrf.mxu0
    %v604 = vadd.f32 0.0, %v603
    %v605 = vpop.f32.mrf.mxu0
    %v606 = vpop.f32.mrf.mxu0
    %v607 = vadd.f32 0.0, %v606
    %v608 = vpop.f32.mrf.mxu0
    %609 = vmatprep.mubr.bf16.mxu0 0
    %610 = vmatmul.mubr.bf16.gmra.mxu0 %v498
    %v611 = vpop.f32.mrf.mxu0
    %v612 = vadd.f32 0.0, %v611
    %v613 = vpop.f32.mrf.mxu0
    %v614 = vpop.f32.mrf.mxu0
    %v615 = vadd.f32 0.0, %v614
    %v616 = vpop.f32.mrf.mxu0
    %617 = vmatprep.mubr.bf16.mxu0 0
    %618 = vmatmul.mubr.bf16.gmra.mxu0 %v499
    %v619 = vpop.f32.mrf.mxu0
    %v620 = vadd.f32 0.0, %v619
    %v621 = vpop.f32.mrf.mxu0
    %v622 = vpop.f32.mrf.mxu0
    %v623 = vadd.f32 0.0, %v622
    %v624 = vpop.f32.mrf.mxu0
    %625 = vmatprep.mubr.bf16.mxu0 0
    %626 = vmatmul.mubr.bf16.gmra.mxu0 %v500
    %v627 = vpop.f32.mrf.mxu0
    %v628 = vadd.f32 0.0, %v627
    %v629 = vpop.f32.mrf.mxu0
    %v630 = vpop.f32.mrf.mxu0
    %v631 = vadd.f32 0.0, %v630
    %v632 = vpop.f32.mrf.mxu0
    %633 = vmatprep.mubr.bf16.mxu0 0
    %634 = vmatmul.mubr.bf16.gmra.mxu0 %v501
    %v635 = vpop.f32.mrf.mxu0
    %v636 = vadd.f32 0.0, %v635
    %v637 = vpop.f32.mrf.mxu0
    %v638 = vpop.f32.mrf.mxu0
    %v639 = vadd.f32 0.0, %v638
    %v640 = vpop.f32.mrf.mxu0
    %641 = vmatprep.mubr.bf16.mxu0 0
    %642 = vmatmul.mubr.bf16.gmra.mxu0 %v502
    %v643 = vpop.f32.mrf.mxu0
    %v644 = vadd.f32 0.0, %v643
    %v645 = vpop.f32.mrf.mxu0
    %v646 = vpop.f32.mrf.mxu0
    %v647 = vadd.f32 0.0, %v646
    %v648 = vpop.f32.mrf.mxu0
    %649 = vmatprep.mubr.bf16.mxu0 0
    %650 = vmatmul.mubr.bf16.gmra.mxu0 %v503
    %v651 = vpop.f32.mrf.mxu0
    %v652 = vadd.f32 0.0, %v651
    %v653 = vpop.f32.mrf.mxu0
    %v654 = vpop.f32.mrf.mxu0
    %v655 = vadd.f32 0.0, %v654
    %v656 = vpop.f32.mrf.mxu0
    %657 = vmatprep.mubr.bf16.mxu0 0
    %658 = vmatmul.mubr.bf16.gmra.mxu0 %v504
    %v659 = vpop.f32.mrf.mxu0
    %v660 = vadd.f32 0.0, %v659
    %v661 = vpop.f32.mrf.mxu0
    %v662 = vpop.f32.mrf.mxu0
    %v663 = vadd.f32 0.0, %v662
    %v664 = vpop.f32.mrf.mxu0
    %665 = vdwg.mxu0
    %v666 = vpack.c.bf16 %v607, %v604
    %v667 = vpack.c.bf16 %v615, %v612
    %v668 = vpack.c.bf16 %v623, %v620
    %v669 = vpack.c.bf16 %v631, %v628
    %v670 = vpack.c.bf16 %v639, %v636
    %v671 = vpack.c.bf16 %v647, %v644
    %v672 = vpack.c.bf16 %v655, %v652
    %v673 = vpack.c.bf16 %v663, %v660
    %v674 = vld [vmem:[%s5] sm:$0x1]
    %v676 = vlaneseq
    %v677 = vshrl.u32 %v676, 7
    %v678 = vsub.s32 0, %v677
    %v679 = vrot.slane %v674, %v678
    %681 = vmatprep.subr.bf16.mxu0 0
    %682 = vmatpush1.bf16.msra.mxu0 %v673
    %683 = vmatprep.subr.bf16.mxu0 0
    %684 = vmatpush1.bf16.msra.mxu0 %v672
    %685 = vmatprep.subr.bf16.mxu0 0
    %686 = vmatpush1.bf16.msra.mxu0 %v671
    %687 = vmatprep.subr.bf16.mxu0 0
    %688 = vmatpush1.bf16.msra.mxu0 %v670
    %689 = vmatprep.subr.bf16.mxu0 0
    %690 = vmatpush1.bf16.msra.mxu0 %v669
    %691 = vmatprep.subr.bf16.mxu0 0
    %692 = vmatpush1.bf16.msra.mxu0 %v668
    %693 = vmatprep.subr.bf16.mxu0 0
    %694 = vmatpush1.bf16.msra.mxu0 %v667
    %695 = vmatprep.subr.bf16.mxu0 0
    %696 = vmatpush1.bf16.msra.mxu0 %v666
    %697 = vmatprep.subr.bf16.mxu0 0
    %698 = vmatpush2.bf16.msra.mxu0 0
    %699 = vmatprep.subr.bf16.mxu0 0
    %700 = vmatpush2.bf16.msra.mxu0 0
    %701 = vmatprep.subr.bf16.mxu0 0
    %702 = vmatpush2.bf16.msra.mxu0 0
    %703 = vmatprep.subr.bf16.mxu0 0
    %704 = vmatpush2.bf16.msra.mxu0 0
    %705 = vmatprep.subr.bf16.mxu0 0
    %706 = vmatpush2.bf16.msra.mxu0 0
    %707 = vmatprep.subr.bf16.mxu0 0
    %708 = vmatpush2.bf16.msra.mxu0 0
    %709 = vmatprep.subr.bf16.mxu0 0
    %710 = vmatpush2.bf16.msra.mxu0 0
    %711 = vmatprep.subr.bf16.mxu0 0
    %712 = vmatpush2.bf16.msra.mxu0 0
    %713 = vmatprep.mubr.bf16.mxu0 0
    %714 = vmatmul.mubr.bf16.gmra.mxu0 %v368
    %v715 = vpop.f32.mrf.mxu0
    %v716 = vadd.f32 %v679, %v715
    %v717 = vpop.f32.mrf.mxu0
    %v718 = vpop.f32.mrf.mxu0
    %v719 = vadd.f32 %v679, %v718
    %v720 = vpop.f32.mrf.mxu0
    %721 = vmatprep.mubr.bf16.mxu0 0
    %722 = vmatmul.mubr.bf16.gmra.mxu0 %v369
    %v723 = vpop.f32.mrf.mxu0
    %v724 = vadd.f32 %v679, %v723
    %v725 = vpop.f32.mrf.mxu0
    %v726 = vpop.f32.mrf.mxu0
    %v727 = vadd.f32 %v679, %v726
    %v728 = vpop.f32.mrf.mxu0
    %729 = vmatprep.mubr.bf16.mxu0 0
    %730 = vmatmul.mubr.bf16.gmra.mxu0 %v370
    %v731 = vpop.f32.mrf.mxu0
    %v732 = vadd.f32 %v679, %v731
    %v733 = vpop.f32.mrf.mxu0
    %v734 = vpop.f32.mrf.mxu0
    %v735 = vadd.f32 %v679, %v734
    %v736 = vpop.f32.mrf.mxu0
    %737 = vmatprep.mubr.bf16.mxu0 0
    %738 = vmatmul.mubr.bf16.gmra.mxu0 %v371
    %v739 = vpop.f32.mrf.mxu0
    %v740 = vadd.f32 %v679, %v739
    %v741 = vpop.f32.mrf.mxu0
    %v742 = vpop.f32.mrf.mxu0
    %v743 = vadd.f32 %v679, %v742
    %v744 = vpop.f32.mrf.mxu0
    %745 = vmatprep.mubr.bf16.mxu0 0
    %746 = vmatmul.mubr.bf16.gmra.mxu0 %v372
    %v747 = vpop.f32.mrf.mxu0
    %v748 = vadd.f32 %v679, %v747
    %v749 = vpop.f32.mrf.mxu0
    %v750 = vpop.f32.mrf.mxu0
    %v751 = vadd.f32 %v679, %v750
    %v752 = vpop.f32.mrf.mxu0
    %753 = vmatprep.mubr.bf16.mxu0 0
    %754 = vmatmul.mubr.bf16.gmra.mxu0 %v373
    %v755 = vpop.f32.mrf.mxu0
    %v756 = vadd.f32 %v679, %v755
    %v757 = vpop.f32.mrf.mxu0
    %v758 = vpop.f32.mrf.mxu0
    %v759 = vadd.f32 %v679, %v758
    %v760 = vpop.f32.mrf.mxu0
    %761 = vmatprep.mubr.bf16.mxu0 0
    %762 = vmatmul.mubr.bf16.gmra.mxu0 %v374
    %v763 = vpop.f32.mrf.mxu0
    %v764 = vadd.f32 %v679, %v763
    %v765 = vpop.f32.mrf.mxu0
    %v766 = vpop.f32.mrf.mxu0
    %v767 = vadd.f32 %v679, %v766
    %v768 = vpop.f32.mrf.mxu0
    %769 = vmatprep.mubr.bf16.mxu0 0
    %770 = vmatmul.mubr.bf16.gmra.mxu0 %v375
    %v771 = vpop.f32.mrf.mxu0
    %v772 = vadd.f32 %v679, %v771
    %v773 = vpop.f32.mrf.mxu0
    %v774 = vpop.f32.mrf.mxu0
    %v775 = vadd.f32 %v679, %v774
    %v776 = vpop.f32.mrf.mxu0
    %777 = vdwg.mxu0
    %v778 = vlaneseq
    %v779 = vand.u32 %v778, 127
    %vm780 = vcmp.lt.s32.totalorder %v779, 8
    %v781 = vsel %vm780, %v716, -1e+30
    %v782 = vsel %vm780, %v719, -1e+30
    %v783 = vsel %vm780, %v724, -1e+30
    %v784 = vsel %vm780, %v727, -1e+30
    %v785 = vsel %vm780, %v732, -1e+30
    %v786 = vsel %vm780, %v735, -1e+30
    %v787 = vsel %vm780, %v740, -1e+30
    %v788 = vsel %vm780, %v743, -1e+30
    %v789 = vsel %vm780, %v748, -1e+30
    %v790 = vsel %vm780, %v751, -1e+30
    %v791 = vsel %vm780, %v756, -1e+30
    %v792 = vsel %vm780, %v759, -1e+30
    %v793 = vsel %vm780, %v764, -1e+30
    %v794 = vsel %vm780, %v767, -1e+30
    %v795 = vsel %vm780, %v772, -1e+30
    %v796 = vsel %vm780, %v775, -1e+30
    %797 = vmax.xlane.f32.xlu0 %v781
    %v798 = vpop.xlane.xlu0 %797
    %799 = vmax.xlane.f32.xlu0 %v782
    %v800 = vpop.xlane.xlu0 %799
    %801 = vmax.xlane.f32.xlu0 %v783
    %v802 = vpop.xlane.xlu0 %801
    %803 = vmax.xlane.f32.xlu0 %v784
    %v804 = vpop.xlane.xlu0 %803
    %805 = vmax.xlane.f32.xlu0 %v785
    %v806 = vpop.xlane.xlu0 %805
    %807 = vmax.xlane.f32.xlu0 %v786
    %v808 = vpop.xlane.xlu0 %807
    %809 = vmax.xlane.f32.xlu0 %v787
    %v810 = vpop.xlane.xlu0 %809
    %811 = vmax.xlane.f32.xlu0 %v788
    %v812 = vpop.xlane.xlu0 %811
    %813 = vmax.xlane.f32.xlu0 %v789
    %v814 = vpop.xlane.xlu0 %813
    %815 = vmax.xlane.f32.xlu0 %v790
    %v816 = vpop.xlane.xlu0 %815
    %817 = vmax.xlane.f32.xlu0 %v791
    %v818 = vpop.xlane.xlu0 %817
    %819 = vmax.xlane.f32.xlu0 %v792
    %v820 = vpop.xlane.xlu0 %819
    %821 = vmax.xlane.f32.xlu0 %v793
    %v822 = vpop.xlane.xlu0 %821
    %823 = vmax.xlane.f32.xlu0 %v794
    %v824 = vpop.xlane.xlu0 %823
    %825 = vmax.xlane.f32.xlu0 %v795
    %v826 = vpop.xlane.xlu0 %825
    %827 = vmax.xlane.f32.xlu0 %v796
    %v828 = vpop.xlane.xlu0 %827
    %v829 = vsub.f32 %v781, %v798
    %v830 = vsub.f32 %v782, %v800
    %v831 = vsub.f32 %v783, %v802
    %v832 = vsub.f32 %v784, %v804
    %v833 = vsub.f32 %v785, %v806
    %v834 = vsub.f32 %v786, %v808
    %v835 = vsub.f32 %v787, %v810
    %v836 = vsub.f32 %v788, %v812
    %v837 = vsub.f32 %v789, %v814
    %v838 = vsub.f32 %v790, %v816
    %v839 = vsub.f32 %v791, %v818
    %v840 = vsub.f32 %v792, %v820
    %v841 = vsub.f32 %v793, %v822
    %v842 = vsub.f32 %v794, %v824
    %v843 = vsub.f32 %v795, %v826
    %v844 = vsub.f32 %v796, %v828
    %v845 = vmul.f32 %v829, 1.442695
    %v846 = vpow.pop %v845
    %v847 = vmul.f32 %v830, 1.442695
    %v848 = vpow.pop %v847
    %v849 = vmul.f32 %v831, 1.442695
    %v850 = vpow.pop %v849
    %v851 = vmul.f32 %v832, 1.442695
    %v852 = vpow.pop %v851
    %v853 = vmul.f32 %v833, 1.442695
    %v854 = vpow.pop %v853
    %v855 = vmul.f32 %v834, 1.442695
    %v856 = vpow.pop %v855
    %v857 = vmul.f32 %v835, 1.442695
    %v858 = vpow.pop %v857
    %v859 = vmul.f32 %v836, 1.442695
    %v860 = vpow.pop %v859
    %v861 = vmul.f32 %v837, 1.442695
    %v862 = vpow.pop %v861
    %v863 = vmul.f32 %v838, 1.442695
    %v864 = vpow.pop %v863
    %v865 = vmul.f32 %v839, 1.442695
    %v866 = vpow.pop %v865
    %v867 = vmul.f32 %v840, 1.442695
    %v868 = vpow.pop %v867
    %v869 = vmul.f32 %v841, 1.442695
    %v870 = vpow.pop %v869
    %v871 = vmul.f32 %v842, 1.442695
    %v872 = vpow.pop %v871
    %v873 = vmul.f32 %v843, 1.442695
    %v874 = vpow.pop %v873
    %v875 = vmul.f32 %v844, 1.442695
    %v876 = vpow.pop %v875
    %877 = vadd.xlane.f32.xlu0 %v846
    %v878 = vpop.xlane.xlu0 %877
    %879 = vadd.xlane.f32.xlu0 %v848
    %v880 = vpop.xlane.xlu0 %879
    %881 = vadd.xlane.f32.xlu0 %v850
    %v882 = vpop.xlane.xlu0 %881
    %883 = vadd.xlane.f32.xlu0 %v852
    %v884 = vpop.xlane.xlu0 %883
    %885 = vadd.xlane.f32.xlu0 %v854
    %v886 = vpop.xlane.xlu0 %885
    %887 = vadd.xlane.f32.xlu0 %v856
    %v888 = vpop.xlane.xlu0 %887
    %889 = vadd.xlane.f32.xlu0 %v858
    %v890 = vpop.xlane.xlu0 %889
    %891 = vadd.xlane.f32.xlu0 %v860
    %v892 = vpop.xlane.xlu0 %891
    %893 = vadd.xlane.f32.xlu0 %v862
    %v894 = vpop.xlane.xlu0 %893
    %895 = vadd.xlane.f32.xlu0 %v864
    %v896 = vpop.xlane.xlu0 %895
    %897 = vadd.xlane.f32.xlu0 %v866
    %v898 = vpop.xlane.xlu0 %897
    %899 = vadd.xlane.f32.xlu0 %v868
    %v900 = vpop.xlane.xlu0 %899
    %901 = vadd.xlane.f32.xlu0 %v870
    %v902 = vpop.xlane.xlu0 %901
    %903 = vadd.xlane.f32.xlu0 %v872
    %v904 = vpop.xlane.xlu0 %903
    %905 = vadd.xlane.f32.xlu0 %v874
    %v906 = vpop.xlane.xlu0 %905
    %907 = vadd.xlane.f32.xlu0 %v876
    %v908 = vpop.xlane.xlu0 %907
    %v909 = vlog2.pop %v878
    %v910 = vmul.f32 %v909, 0.6931472
    %v911 = vlog2.pop %v880
    %v912 = vmul.f32 %v911, 0.6931472
    %v913 = vlog2.pop %v882
    %v914 = vmul.f32 %v913, 0.6931472
    %v915 = vlog2.pop %v884
    %v916 = vmul.f32 %v915, 0.6931472
    %v917 = vlog2.pop %v886
    %v918 = vmul.f32 %v917, 0.6931472
    %v919 = vlog2.pop %v888
    %v920 = vmul.f32 %v919, 0.6931472
    %v921 = vlog2.pop %v890
    %v922 = vmul.f32 %v921, 0.6931472
    %v923 = vlog2.pop %v892
    %v924 = vmul.f32 %v923, 0.6931472
    %v925 = vlog2.pop %v894
    %v926 = vmul.f32 %v925, 0.6931472
    %v927 = vlog2.pop %v896
    %v928 = vmul.f32 %v927, 0.6931472
    %v929 = vlog2.pop %v898
    %v930 = vmul.f32 %v929, 0.6931472
    %v931 = vlog2.pop %v900
    %v932 = vmul.f32 %v931, 0.6931472
    %v933 = vlog2.pop %v902
    %v934 = vmul.f32 %v933, 0.6931472
    %v935 = vlog2.pop %v904
    %v936 = vmul.f32 %v935, 0.6931472
    %v937 = vlog2.pop %v906
    %v938 = vmul.f32 %v937, 0.6931472
    %v939 = vlog2.pop %v908
    %v940 = vmul.f32 %v939, 0.6931472
    %v941 = vsub.f32 %v829, %v910
    %v942 = vsub.f32 %v830, %v912
    %v943 = vsub.f32 %v831, %v914
    %v944 = vsub.f32 %v832, %v916
    %v945 = vsub.f32 %v833, %v918
    %v946 = vsub.f32 %v834, %v920
    %v947 = vsub.f32 %v835, %v922
    %v948 = vsub.f32 %v836, %v924
    %v949 = vsub.f32 %v837, %v926
    %v950 = vsub.f32 %v838, %v928
    %v951 = vsub.f32 %v839, %v930
    %v952 = vsub.f32 %v840, %v932
    %v953 = vsub.f32 %v841, %v934
    %v954 = vsub.f32 %v842, %v936
    %v955 = vsub.f32 %v843, %v938
    %v956 = vsub.f32 %v844, %v940
    %957 = vst [vmem:[#allocation10] sm:$0xff] %v941
    %958 = vst [vmem:[#allocation10 + $0x8] sm:$0xff] %v942
    %959 = vst [vmem:[#allocation10 + $0x10] sm:$0xff] %v943
    %960 = vst [vmem:[#allocation10 + $0x18] sm:$0xff] %v944
    %961 = vst [vmem:[#allocation10 + $0x20] sm:$0xff] %v945
    %962 = vst [vmem:[#allocation10 + $0x28] sm:$0xff] %v946
    %963 = vst [vmem:[#allocation10 + $0x30] sm:$0xff] %v947
    %964 = vst [vmem:[#allocation10 + $0x38] sm:$0xff] %v948
    %965 = vst [vmem:[#allocation10 + $0x40] sm:$0xff] %v949
    %966 = vst [vmem:[#allocation10 + $0x48] sm:$0xff] %v950
    %967 = vst [vmem:[#allocation10 + $0x50] sm:$0xff] %v951
    %968 = vst [vmem:[#allocation10 + $0x58] sm:$0xff] %v952
    %969 = vst [vmem:[#allocation10 + $0x60] sm:$0xff] %v953
    %970 = vst [vmem:[#allocation10 + $0x68] sm:$0xff] %v954
    %971 = vst [vmem:[#allocation10 + $0x70] sm:$0xff] %v955
    %972 = vst [vmem:[#allocation10 + $0x78] sm:$0xff] %v956
    // Predicated region
    $region42: #{tpu_custom_call.1} parent=1 // pred_check
      _
    $region43: #{tpu_custom_call.1} parent=1 // pred_check_branch
      %974 = sbr.rel (0) target = $region45
    $region44: #{tpu_custom_call.1} parent=1 // pred_region
      %s976 = ssub.s32 2048, 2048
      %977 = vsyncadd [#allocation4], %s976
      %s978 = sshll.u32 [#allocation10], 4
      %s979 = int_to_ptr.vmem [resolvable:$true] %s978
      %984 = dma.vmem_to_hbm [thread:$0]  %s979, 2048, %s6, [#allocation4], 128, 128, 8
    $region45: #{tpu_custom_call.1} parent=1 // pred_fallthru
      _
    // Predicated region
    $region46: #{tpu_custom_call.1} parent=1 // pred_check
      _
    $region47: #{tpu_custom_call.1} parent=1 // pred_check_branch
      %986 = sbr.rel (0) target = $region49
    $region48: #{tpu_custom_call.1} parent=1 // pred_region
      %987 = dma.done [#allocation4], 2048
    $region49: #{tpu_custom_call.1} parent=1 // pred_fallthru
      _
    %988 = vsyncpa [#allocation3], 1
    %989 = vsyncpa [#allocation6], 1
    %990 = vsyncpa [#allocation9], 1
    %991 = vsyncpa [#allocation4], 1

</llo_original>
